<compile_context>
chip_gen: v5e
topology: v5e:2x2
jax: 0.10.0
libtpu: 0.0.40
codegen_flags: <defaults>
</compile_context>

<pallas_src>
import functools

import jax
import jax.numpy as jnp
from jax.experimental import pallas as pl
from jax.experimental.pallas import tpu as pltpu


def _round_up(x, m):
    return (x + m - 1) // m * m


def _reward_criterion_kernel(seq_ref, logp_ref, rew_ref, tot_ref, cnt_ref,
                             *, eos_id, batch, seq_len, block_b):
    seq = seq_ref[...]                                # (block_b, T_pad) int
    logp = logp_ref[...].astype(jnp.float32)          # cast on-chip (input may be bf16)
    rew = rew_ref[...]                                # (block_b, 1) f32

    shape = seq.shape
    col = jax.lax.broadcasted_iota(jnp.int32, shape, 1)
    row = jax.lax.broadcasted_iota(jnp.int32, shape, 0) + pl.program_id(0) * block_b

    # raw mask: token is "real" (non-pad, non-eos)
    raw = jnp.logical_and(seq > 0, seq != eos_id).astype(jnp.float32)

    # shifted mask: col 0 always on, col t uses raw[t-1]; the roll wrap-around at col 0
    # is discarded by the col == 0 select (the whole T axis lives in this block).
    prev = pltpu.roll(raw, shift=1, axis=1)
    mask = jnp.where(col == 0, jnp.float32(1.0), prev)

    # drop padded columns (col >= seq_len) and padded rows (row >= batch)
    valid = jnp.logical_and(col < seq_len, row < batch)
    mask = jnp.where(valid, mask, jnp.float32(0.0))

    # reduce along T first (XLU), then apply the per-row reward (VPU)
    tot_ref[...] = jnp.sum(-logp * mask, axis=1, keepdims=True) * rew
    cnt_ref[...] = jnp.sum(mask, axis=1, keepdims=True)


def reward_criterion(seq, logp, rewards, eos_id, *, block_b=None):
    """Scalar loss identical to the PyTorch RewardCriterion forward."""
    B, T = seq.shape
    if not jnp.issubdtype(seq.dtype, jnp.integer):
        seq = seq.astype(jnp.int32)
    # logp is used in its NATIVE dtype (bf16 or f32) — no wrapper upcast (halves HBM traffic
    # for bf16 log-probs); the kernel accumulates in f32.
    rew = rewards.astype(jnp.float32).reshape(B, 1)

    T_pad = _round_up(T, 128)

    # Pick the biggest row tile whose double-buffered (seq + logp) blocks fit scoped VMEM
    # on every generation (v7x has only 64 MiB physical / 32 MiB scoped).
    if block_b is None:
        bytes_per_row = T_pad * (seq.dtype.itemsize + logp.dtype.itemsize)
        budget = 7 * 1024 * 1024                    # per-block budget; x2 double buffering
        block_b = max(8, min(1024, (budget // bytes_per_row) // 8 * 8))
    block_b = min(int(block_b), _round_up(B, 8))
    block_b = max(8, (block_b // 8) * 8)
    B_pad = _round_up(B, block_b)

    pad_t = T_pad - T
    pad_b = B_pad - B
    if pad_t:
        seq = jnp.pad(seq, ((0, 0), (0, pad_t)))
        logp = jnp.pad(logp, ((0, 0), (0, pad_t)))
    if pad_b:
        seq = jnp.pad(seq, ((0, pad_b), (0, 0)))
        logp = jnp.pad(logp, ((0, pad_b), (0, 0)))
        rew = jnp.pad(rew, ((0, pad_b), (0, 0)))

    num_blocks = B_pad // block_b
    kernel = functools.partial(
        _reward_criterion_kernel,
        eos_id=int(eos_id), batch=B, seq_len=T, block_b=block_b)

    tot, cnt = pl.pallas_call(
        kernel,
        grid=(num_blocks,),
        in_specs=[
            pl.BlockSpec((block_b, T_pad), lambda i: (i, 0)),   # seq
            pl.BlockSpec((block_b, T_pad), lambda i: (i, 0)),   # logP
            pl.BlockSpec((block_b, 1), lambda i: (i, 0)),       # rewards
        ],
        out_specs=[
            pl.BlockSpec((block_b, 1), lambda i: (i, 0)),       # per-row masked sum
            pl.BlockSpec((block_b, 1), lambda i: (i, 0)),       # per-row mask count
        ],
        out_shape=[
            jax.ShapeDtypeStruct((B_pad, 1), jnp.float32),
            jax.ShapeDtypeStruct((B_pad, 1), jnp.float32),
        ],
        compiler_params=pltpu.CompilerParams(
            dimension_semantics=("parallel",),
            vmem_limit_bytes=32 * 1024 * 1024,
        ),
    )(seq, logp, rew)

    # tiny final reduce + exact divide (keeps the scalar bit-comparable to the reference)
    return jnp.sum(tot) / jnp.sum(cnt)


def _reference(seq, logp, rewards, eos_id):
    """Pure-JAX reference mirroring the PyTorch code (masked_select -> mean)."""
    raw = (seq > 0) & (seq != eos_id)
    mask = jnp.concatenate([jnp.ones((seq.shape[0], 1), bool), raw[:, :-1]], axis=1)
    rew = jnp.broadcast_to(rewards.reshape(-1, 1), logp.shape)
    m = mask.astype(jnp.float32)
    return jnp.sum(-logp * rew * m) / jnp.sum(m)


if __name__ == "__main__":
    EOS_ID = 3

    # --- small deterministic test (B=2, T=8, f32 logP) ---
    B, T = 2, 8
    key = jax.random.PRNGKey(0)
    k_seq, k_logp, k_rew = jax.random.split(key, 3)
    seq = jax.random.randint(k_seq, (B, T), minval=0, maxval=10, dtype=jnp.int32)
    logp = -jax.random.uniform(k_logp, (B, T), dtype=jnp.float32) * 3.0
    rewards = jax.random.normal(k_rew, (B,), dtype=jnp.float32)

    loss = reward_criterion(seq, logp, rewards, EOS_ID)
    jax.block_until_ready(loss)
    ref = _reference(seq, logp, rewards, EOS_ID)
    assert jnp.allclose(loss, ref, rtol=1e-5, atol=1e-6), (loss, ref)

    # --- multi-block / padded / bf16 path (exercises the grid + row/col masking) ---
    B2, T2 = 300, 20
    k2s, k2l, k2r = jax.random.split(jax.random.PRNGKey(1), 3)
    seq2 = jax.random.randint(k2s, (B2, T2), minval=0, maxval=10, dtype=jnp.int32)
    logp2 = (-jax.random.uniform(k2l, (B2, T2), dtype=jnp.float32) * 3.0).astype(jnp.bfloat16)
    rew2 = jax.random.normal(k2r, (B2,), dtype=jnp.float32)

    loss2 = reward_criterion(seq2, logp2, rew2, EOS_ID, block_b=64)
    jax.block_until_ready(loss2)
    ref2 = _reference(seq2, logp2.astype(jnp.float32), rew2, EOS_ID)
    assert jnp.allclose(loss2, ref2, rtol=1e-4, atol=1e-5), (loss2, ref2)

    print("KERNEL_OK")
</pallas_src>

<mosaic_0001>
module attributes {stable_mosaic.version = 11 : i64} {
  func.func @_reward_criterion_kernel(%arg0: i32, %arg1: memref<8x128xi32, #tpu.memory_space<vmem>>, %arg2: memref<8x128xf32, #tpu.memory_space<vmem>>, %arg3: memref<8x1xf32, #tpu.memory_space<vmem>>, %arg4: memref<8x1xf32, #tpu.memory_space<vmem>>, %arg5: memref<8x1xf32, #tpu.memory_space<vmem>>) attributes {dimension_semantics = [#tpu.dimension_semantics<parallel>], iteration_bounds = array<i64: 1>, scalar_prefetch = 0 : i64, scratch_operands = 0 : i64, tpu.core_type = #tpu.core_type<tc>, window_params = [{transform_indices = @transform_0, window_bounds = array<i64: 8, 128>}, {transform_indices = @transform_1, window_bounds = array<i64: 8, 128>}, {transform_indices = @transform_2, window_bounds = array<i64: 8, 1>}, {transform_indices = @transform_3, window_bounds = array<i64: 8, 1>}, {transform_indices = @transform_4, window_bounds = array<i64: 8, 1>}]} {
    %c0 = arith.constant 0 : index
    %c0_0 = arith.constant 0 : index
    %0 = vector.load %arg1[%c0, %c0_0] : memref<8x128xi32, #tpu.memory_space<vmem>>, vector<8x128xi32>
    %c0_1 = arith.constant 0 : index
    %c0_2 = arith.constant 0 : index
    %1 = vector.load %arg2[%c0_1, %c0_2] : memref<8x128xf32, #tpu.memory_space<vmem>>, vector<8x128xf32>
    %c0_3 = arith.constant 0 : index
    %c0_4 = arith.constant 0 : index
    %2 = vector.load %arg3[%c0_3, %c0_4] : memref<8x1xf32, #tpu.memory_space<vmem>>, vector<8x1xf32>
    %3 = tpu.iota {dimensions = array<i32: 1>} : vector<8x128xi32>
    %4 = tpu.iota {dimensions = array<i32: 0>} : vector<8x128xi32>
    %c8_i32 = arith.constant 8 : i32
    %5 = arith.muli %arg0, %c8_i32 : i32
    %6 = vector.broadcast %5 : i32 to vector<8x128xi32>
    %7 = arith.addi %4, %6 : vector<8x128xi32>
    %c0_i32 = arith.constant 0 : i32
    %8 = vector.broadcast %c0_i32 : i32 to vector<8x128xi32>
    %9 = arith.cmpi sgt, %0, %8 : vector<8x128xi32>
    %c3_i32 = arith.constant 3 : i32
    %10 = vector.broadcast %c3_i32 : i32 to vector<8x128xi32>
    %11 = arith.cmpi ne, %0, %10 : vector<8x128xi32>
    %12 = arith.andi %9, %11 : vector<8x128xi1>
    %13 = arith.extui %12 : vector<8x128xi1> to vector<8x128xi32>
    %14 = arith.sitofp %13 : vector<8x128xi32> to vector<8x128xf32>
    %c1_i32 = arith.constant 1 : i32
    %15 = tpu.dynamic_rotate %14 by %c1_i32 dim 1 : vector<8x128xf32>, i32 -> vector<8x128xf32>
    %c0_i32_5 = arith.constant 0 : i32
    %16 = vector.broadcast %c0_i32_5 : i32 to vector<8x128xi32>
    %17 = arith.cmpi eq, %3, %16 : vector<8x128xi32>
    %cst = arith.constant 1.000000e+00 : f32
    %18 = vector.broadcast %cst : f32 to vector<8x128xf32>
    %19 = arith.select %17, %18, %15 : vector<8x128xi1>, vector<8x128xf32>
    %c8_i32_6 = arith.constant 8 : i32
    %20 = vector.broadcast %c8_i32_6 : i32 to vector<8x128xi32>
    %21 = arith.cmpi slt, %3, %20 : vector<8x128xi32>
    %c2_i32 = arith.constant 2 : i32
    %22 = vector.broadcast %c2_i32 : i32 to vector<8x128xi32>
    %23 = arith.cmpi slt, %7, %22 : vector<8x128xi32>
    %24 = arith.andi %21, %23 : vector<8x128xi1>
    %cst_7 = arith.constant 0.000000e+00 : f32
    %25 = vector.broadcast %cst_7 : f32 to vector<8x128xf32>
    %26 = arith.select %24, %19, %25 : vector<8x128xi1>, vector<8x128xf32>
    %cst_8 = arith.constant 0.000000e+00 : f32
    %27 = vector.broadcast %cst_8 : f32 to vector<8x128xf32>
    %28 = arith.subf %27, %1 : vector<8x128xf32>
    %29 = arith.mulf %28, %26 : vector<8x128xf32>
    %cst_9 = arith.constant dense<0.000000e+00> : vector<8xf32>
    %30 = vector.multi_reduction <add>, %29, %cst_9 [1] : vector<8x128xf32> to vector<8xf32>
    %31 = vector.shape_cast %30 : vector<8xf32> to vector<8x1xf32>
    %32 = arith.mulf %31, %2 : vector<8x1xf32>
    %c0_10 = arith.constant 0 : index
    %c0_11 = arith.constant 0 : index
    %33 = vector.load %arg4[%c0_10, %c0_11] : memref<8x1xf32, #tpu.memory_space<vmem>>, vector<8x1xf32>
    tpu.vector_store %arg4[%c0_10, %c0_11], %32 {strides = array<i32>} : memref<8x1xf32, #tpu.memory_space<vmem>>, vector<8x1xf32>,
    %cst_12 = arith.constant dense<0.000000e+00> : vector<8xf32>
    %34 = vector.multi_reduction <add>, %26, %cst_12 [1] : vector<8x128xf32> to vector<8xf32>
    %35 = vector.shape_cast %34 : vector<8xf32> to vector<8x1xf32>
    %c0_13 = arith.constant 0 : index
    %c0_14 = arith.constant 0 : index
    %36 = vector.load %arg5[%c0_13, %c0_14] : memref<8x1xf32, #tpu.memory_space<vmem>>, vector<8x1xf32>
    tpu.vector_store %arg5[%c0_13, %c0_14], %35 {strides = array<i32>} : memref<8x1xf32, #tpu.memory_space<vmem>>, vector<8x1xf32>,
    return
  }
  func.func @transform_0(%arg0: i32) -> (i32, i32) {
    %c0_i32 = arith.constant 0 : i32
    %c0_i32_0 = arith.constant 0 : i32
    return %arg0, %c0_i32 : i32, i32
  }
  func.func @transform_1(%arg0: i32) -> (i32, i32) {
    %c0_i32 = arith.constant 0 : i32
    %c0_i32_0 = arith.constant 0 : i32
    return %arg0, %c0_i32 : i32, i32
  }
  func.func @transform_2(%arg0: i32) -> (i32, i32) {
    %c0_i32 = arith.constant 0 : i32
    %c0_i32_0 = arith.constant 0 : i32
    return %arg0, %c0_i32 : i32, i32
  }
  func.func @transform_3(%arg0: i32) -> (i32, i32) {
    %c0_i32 = arith.constant 0 : i32
    %c0_i32_0 = arith.constant 0 : i32
    return %arg0, %c0_i32 : i32, i32
  }
  func.func @transform_4(%arg0: i32) -> (i32, i32) {
    %c0_i32 = arith.constant 0 : i32
    %c0_i32_0 = arith.constant 0 : i32
    return %arg0, %c0_i32 : i32, i32
  }
}

</mosaic_0001>

<llo_original>
// kernel: tpu_custom_call.1
$region0: #{tpu_custom_call.1}
  #allocation0 [shape = 'u32[]', space=smem, size = 0x4, offset = 0x4, fixed_abs, tag = 'smem constant byte address 0x4 - core index']
  #allocation1 [shape = 'u32[72,128]{1,0:T(1,128)}', space=vmem, size = 0x9000, scoped, tag = 'internal scratch']
  %s0 = inlined_call_operand.vmem [shape: s32[8,128], index: 0, kind: input, shape index: {}]
  %s1 = inlined_call_operand.hbm [shape: f32[8,128], index: 1, kind: input, shape index: {}]
  %s2 = inlined_call_operand.vmem [shape: f32[8,1], index: 2, kind: input, shape index: {}]
  %s3 = inlined_call_operand.vmem [shape: f32[8,1], index: 3, kind: output, shape index: {0}]
  %s4 = inlined_call_operand.vmem [shape: f32[8,1], index: 4, kind: output, shape index: {1}]
  %5 = xla_tuple %s3, %s4
  %s6 = sld [smem:[#allocation0]]
  $region34: #{tpu_custom_call.1} parent=0
    _
  %s8 = ssub.s32 1, %s6
  %s9 = scalar_select 0, %s8, %s6
  $region1: #{tpu_custom_call.1} parent=0
    #allocation2 [shape = 'u8[4096]{0}', space=vmem, size = 0x1000, scoped, tag = 'input window, operand 1, single buffered']
    #allocation3 [shape = 's32[1]{0}', space=sflag, size = 0x4, scoped, tag = 'scoped memory for tpu_custom_call.1']
    %10 = vsyncpa [#allocation3], 0
    // Predicated region
    $region2: #{tpu_custom_call.1} parent=1 // pred_check
      _
    $region3: #{tpu_custom_call.1} parent=1 // pred_check_branch
      %12 = sbr.rel (0) target = $region5
    $region4: #{tpu_custom_call.1} parent=1 // pred_region
      _
    $region5: #{tpu_custom_call.1} parent=1 // pred_fallthru
      _
    // Predicated region
    $region6: #{tpu_custom_call.1} parent=1 // pred_check
      _
    $region7: #{tpu_custom_call.1} parent=1 // pred_check_branch
      %14 = sbr.rel (0) target = $region9
    $region8: #{tpu_custom_call.1} parent=1 // pred_region
      %16 = vsyncadd [#allocation3], 0
      %s18 = sshll.u32 %s1, 4
      %s19 = int_to_ptr.hbm [resolvable:$true] %s18
      %s20 = sshll.u32 [#allocation2], 4
      %s21 = int_to_ptr.vmem [resolvable:$true] %s20
      %23 = dma.hbm_to_vmem [thread:$0]  %s19, 128, %s21, [#allocation3]
    $region9: #{tpu_custom_call.1} parent=1 // pred_fallthru
      _
    // Predicated region
    $region10: #{tpu_custom_call.1} parent=1 // pred_check
      _
    $region11: #{tpu_custom_call.1} parent=1 // pred_check_branch
      %25 = sbr.rel (0) target = $region13
    $region12: #{tpu_custom_call.1} parent=1 // pred_region
      _
    $region13: #{tpu_custom_call.1} parent=1 // pred_fallthru
      _
    // Predicated region
    $region14: #{tpu_custom_call.1} parent=1 // pred_check
      _
    $region15: #{tpu_custom_call.1} parent=1 // pred_check_branch
      %27 = sbr.rel (0) target = $region17
    $region16: #{tpu_custom_call.1} parent=1 // pred_region
      %29 = dma.done [#allocation3], 128
    $region17: #{tpu_custom_call.1} parent=1 // pred_fallthru
      _
    %v30 = vld [vmem:[%s0] sm:$0xff]
    %v31 = vld [vmem:[#allocation2] sm:$0xff]
    %v32 = vld [vmem:[%s2] sm:$0xff]
    %v33 = vlaneseq
    %v34 = vand.u32 %v33, 127
    %v35 = vlaneseq
    %v36 = vshrl.u32 %v35, 7
    %s37 = smul.u32 0, 8
    %v38 = vstv %s37
    %v39 = vadd.s32 %v36, %v38
    %vm40 = vcmp.gt.s32.totalorder %v30, 0
    %vm41 = vcmp.ne.s32.totalorder %v30, 3
    %vm42 = vmand %vm40, %vm41
    %v43 = vsel %vm42, 1, 0
    %v44 = vcvt.s32.f32 %v43
    %45 = vrot.lane.b32.xlu0 %v44, 1
    %v46 = vpop.permute.xlu0 %45
    %vm47 = vcmp.eq.s32.totalorder %v34, 0
    %v48 = vsel %vm47, 1.0, %v46
    %vm49 = vcmp.lt.s32.totalorder %v34, 8
    %vm50 = vcmp.lt.s32.totalorder %v39, 2
    %vm51 = vmand %vm49, %vm50
    %v52 = vsel %vm51, %v48, 0.0
    %v53 = vsub.f32 0.0, %v31
    %v54 = vmul.f32 %v53, %v52
    %55 = vadd.xlane.f32.xlu0 %v54
    %v56 = vpop.xlane.xlu0 %55
    %v57 = vmul.f32 %v56, %v32
    %vm58 = vcmask 7168
    %59 = vst.msk [vmem:[%s3] sm:$0xff] %vm58, %v57
    %60 = vadd.xlane.f32.xlu0 %v52
    %v61 = vpop.xlane.xlu0 %60
    %62 = vst.msk [vmem:[%s4] sm:$0xff] %vm58, %v61
    // Predicated region
    $region18: #{tpu_custom_call.1} parent=1 // pred_check
      _
    $region19: #{tpu_custom_call.1} parent=1 // pred_check_branch
      %64 = sbr.rel (0) target = $region21
    $region20: #{tpu_custom_call.1} parent=1 // pred_region
      _
    $region21: #{tpu_custom_call.1} parent=1 // pred_fallthru
      _
    // Predicated region
    $region22: #{tpu_custom_call.1} parent=1 // pred_check
      _
    $region23: #{tpu_custom_call.1} parent=1 // pred_check_branch
      %66 = sbr.rel (0) target = $region25
    $region24: #{tpu_custom_call.1} parent=1 // pred_region
      _
    $region25: #{tpu_custom_call.1} parent=1 // pred_fallthru
      _
    // Predicated region
    $region26: #{tpu_custom_call.1} parent=1 // pred_check
      _
    $region27: #{tpu_custom_call.1} parent=1 // pred_check_branch
      %68 = sbr.rel (0) target = $region29
    $region28: #{tpu_custom_call.1} parent=1 // pred_region
      _
    $region29: #{tpu_custom_call.1} parent=1 // pred_fallthru
      _
    // Predicated region
    $region30: #{tpu_custom_call.1} parent=1 // pred_check
      _
    $region31: #{tpu_custom_call.1} parent=1 // pred_check_branch
      %70 = sbr.rel (0) target = $region33
    $region32: #{tpu_custom_call.1} parent=1 // pred_region
      _
    $region33: #{tpu_custom_call.1} parent=1 // pred_fallthru
      _
    %71 = vsyncpa [#allocation3], 1

</llo_original>
